<compile_context>
chip_gen: v5e
topology: v5e:2x2
jax: 0.10.0
libtpu: 0.0.40
codegen_flags: <defaults>
</compile_context>

<pallas_src>
import jax
import jax.numpy as jnp
from jax.experimental import pallas as pl
from jax.experimental.pallas import tpu as pltpu


def _round_up(a, m):
    return ((a + m - 1) // m) * m


def _mlp_kernel(x_ref, w1_ref, b1_ref, w2_ref, b2_ref, o_ref):
    # In-kernel cast of the activation tile to the matmul dtype (free on the
    # VPU; avoids a separate XLA cast pass over x in HBM).
    x = x_ref[...].astype(w1_ref.dtype)
    # fc1: [tm, D] @ [D, Hp] -> [tm, Hp], f32 accumulation on the MXU.
    h = jnp.dot(x, w1_ref[...], preferred_element_type=jnp.float32)
    # bias + ReLU in f32.
    h = jnp.maximum(h + b1_ref[...], 0.0)
    # fc2: [tm, Hp] @ [Hp, O] -> [tm, O], f32 accumulation.
    out = jnp.dot(h.astype(w2_ref.dtype), w2_ref[...],
                  preferred_element_type=jnp.float32)
    o_ref[...] = (out + b2_ref[...]).astype(o_ref.dtype)


def mlp_dim_reduction(x, w1, b1, w2, b2, *, compute_dtype=jnp.bfloat16,
                      tm_max=1024):
    """x: [B, input_dim]; w1: [hidden, input] (PyTorch nn.Linear layout);
    b1: [hidden]; w2: [output, hidden]; b2: [output]. Returns [B, output]
    in x.dtype. compute_dtype: matmul operand dtype (bf16 default for the
    v6e/v7x MXU; pass None for full f32)."""
    orig_dtype = x.dtype
    B, D = x.shape
    H, D_w = w1.shape
    O, H_w = w2.shape
    assert D == D_w and H == H_w, "inconsistent weight shapes"

    low_precision = (compute_dtype is not None
                     and jnp.dtype(compute_dtype).itemsize < 4)

    # ---- one-time parameter prep (would be hoisted to param-load time) ----
    # Lane-dense hidden dim: zero-pad H up to a multiple of 128. Exact math:
    # padded h columns are ReLU(x@0 + 0) = 0 and hit zero rows of w2.
    Hp = _round_up(H, 128)
    if Hp != H:
        w1 = jnp.pad(w1, ((0, Hp - H), (0, 0)))
        b1 = jnp.pad(b1, ((0, Hp - H),))
        w2 = jnp.pad(w2, ((0, 0), (0, Hp - H)))
    # Pre-transpose to MXU-native [K, N] so no per-step relayout is emitted.
    w1t = w1.T  # [D, Hp]
    w2t = w2.T  # [Hp, O]
    if compute_dtype is not None:
        w1t = w1t.astype(compute_dtype)
        w2t = w2t.astype(compute_dtype)
    b1_2d = b1.reshape(1, Hp).astype(jnp.float32)
    b2_2d = b2.reshape(1, O).astype(jnp.float32)

    # ---- batch tile selection ----
    # 16-row alignment keeps bf16 vregs fully packed; fall back to 8 for tiny
    # batches / f32 so the block exactly matches the array at demo sizes.
    sub = 16 if (low_precision and B >= 16) else 8
    tm = min(tm_max, _round_up(B, sub))

    # v7x has 2 TensorCores: give a big single-tile batch >=2 parallel grid
    # steps so both cores run (each half still keeps the MXU M-dim fed).
    if pl.cdiv(B, tm) == 1 and tm >= 256:
        tm = _round_up(pl.cdiv(B, 2), sub)

    # Keep the double-buffered working set well under the scoped-VMEM default
    # (32 MiB on v6e/v7x; v7x physical VMEM is only 64 MiB).
    w_item = (jnp.dtype(compute_dtype).itemsize if compute_dtype is not None
              else jnp.dtype(orig_dtype).itemsize)

    def vmem_bytes(t):
        return (2 * t * D * jnp.dtype(orig_dtype).itemsize    # x tile (dbl-buf)
                + 2 * t * O * jnp.dtype(orig_dtype).itemsize  # out tile
                + 2 * (D * Hp + Hp * O) * w_item              # resident weights
                + 2 * (Hp + O) * 4)                           # biases

    VMEM_BUDGET = 20 * 1024 * 1024
    while vmem_bytes(tm) > VMEM_BUDGET and tm > sub:
        tm = max(sub, _round_up(tm // 2, sub))

    grid = (pl.cdiv(B, tm),)

    cost = pl.CostEstimate(
        flops=2 * B * (D * Hp + Hp * O),
        transcendentals=0,
        bytes_accessed=(x.size * x.dtype.itemsize
                        + w1t.size * w1t.dtype.itemsize
                        + w2t.size * w2t.dtype.itemsize
                        + b1_2d.size * 4 + b2_2d.size * 4
                        + B * O * jnp.dtype(orig_dtype).itemsize),
    )

    return pl.pallas_call(
        _mlp_kernel,
        out_shape=jax.ShapeDtypeStruct((B, O), orig_dtype),
        grid_spec=pltpu.PrefetchScalarGridSpec(
            num_scalar_prefetch=0,
            grid=grid,
            in_specs=[
                # x tile marches over the batch (double-buffered by Pallas).
                # A ragged last tile uses Pallas partial-block handling: batch
                # rows are independent and OOB output rows are not written.
                pl.BlockSpec((tm, D), lambda i: (i, 0)),
                # Weights / biases: constant index_map -> resident across grid.
                pl.BlockSpec((D, Hp), lambda i: (0, 0)),
                pl.BlockSpec((1, Hp), lambda i: (0, 0)),
                pl.BlockSpec((Hp, O), lambda i: (0, 0)),
                pl.BlockSpec((1, O), lambda i: (0, 0)),
            ],
            out_specs=pl.BlockSpec((tm, O), lambda i: (i, 0)),
        ),
        compiler_params=pltpu.CompilerParams(
            dimension_semantics=("parallel",)),  # megacore sharding on v7x
        cost_estimate=cost,
    )(x, w1t, b1_2d, w2t, b2_2d)


if __name__ == "__main__":
    # Shapes consistent with the module: input_dim=128, hidden=64, output=32.
    batch, input_dim, hidden_dim, output_dim = 8, 128, 64, 32

    key = jax.random.PRNGKey(0)
    kx, kw1, kb1, kw2, kb2 = jax.random.split(key, 5)

    x = jax.random.normal(kx, (batch, input_dim), dtype=jnp.float32)
    # PyTorch nn.Linear layout: weight is [out, in].
    w1 = jax.random.normal(kw1, (hidden_dim, input_dim), dtype=jnp.float32) * 0.05
    b1 = jax.random.normal(kb1, (hidden_dim,), dtype=jnp.float32) * 0.05
    w2 = jax.random.normal(kw2, (output_dim, hidden_dim), dtype=jnp.float32) * 0.05
    b2 = jax.random.normal(kb2, (output_dim,), dtype=jnp.float32) * 0.05

    # Reference in plain JAX (same math as the PyTorch forward).
    ref = jnp.maximum(x @ w1.T + b1, 0.0) @ w2.T + b2

    # Full-precision path: tight tolerance.
    out_f32 = jax.block_until_ready(
        mlp_dim_reduction(x, w1, b1, w2, b2, compute_dtype=None))
    assert out_f32.shape == (batch, output_dim)
    assert jnp.allclose(out_f32, ref, atol=1e-4, rtol=1e-4)

    # Default bf16-matmul path: looser tolerance (bf16 operand rounding).
    out_bf16 = jax.block_until_ready(mlp_dim_reduction(x, w1, b1, w2, b2))
    assert out_bf16.shape == (batch, output_dim)
    assert jnp.allclose(out_bf16, ref, atol=2e-2, rtol=2e-2)

    print("KERNEL_OK")
</pallas_src>

<mosaic_0001>
module attributes {stable_mosaic.version = 11 : i64} {
  func.func @_mlp_kernel(%arg0: i32, %arg1: memref<8x128xf32, #tpu.memory_space<vmem>>, %arg2: memref<128x128xf32, #tpu.memory_space<vmem>>, %arg3: memref<1x128xf32, #tpu.memory_space<vmem>>, %arg4: memref<128x32xf32, #tpu.memory_space<vmem>>, %arg5: memref<1x32xf32, #tpu.memory_space<vmem>>, %arg6: memref<8x32xf32, #tpu.memory_space<vmem>>) attributes {dimension_semantics = [#tpu.dimension_semantics<parallel>], iteration_bounds = array<i64: 1>, scalar_prefetch = 0 : i64, scratch_operands = 0 : i64, tpu.core_type = #tpu.core_type<tc>, window_params = [{transform_indices = @transform_0, window_bounds = array<i64: 8, 128>}, {pipeline_mode = #tpu.pipeline_mode<synchronous>, transform_indices = @transform_1, window_bounds = array<i64: 128, 128>}, {pipeline_mode = #tpu.pipeline_mode<synchronous>, transform_indices = @transform_2, window_bounds = array<i64: 1, 128>}, {pipeline_mode = #tpu.pipeline_mode<synchronous>, transform_indices = @transform_3, window_bounds = array<i64: 128, 32>}, {pipeline_mode = #tpu.pipeline_mode<synchronous>, transform_indices = @transform_4, window_bounds = array<i64: 1, 32>}, {transform_indices = @transform_5, window_bounds = array<i64: 8, 32>}]} {
    %c0 = arith.constant 0 : index
    %c0_0 = arith.constant 0 : index
    %0 = vector.load %arg1[%c0, %c0_0] : memref<8x128xf32, #tpu.memory_space<vmem>>, vector<8x128xf32>
    %c0_1 = arith.constant 0 : index
    %c0_2 = arith.constant 0 : index
    %1 = vector.load %arg2[%c0_1, %c0_2] : memref<128x128xf32, #tpu.memory_space<vmem>>, vector<128x128xf32>
    %cst = arith.constant dense<0.000000e+00> : vector<8x128xf32>
    %2 = tpu.matmul %0, %1, %cst {dimension_numbers = #tpu.dot_dimension_numbers<[1], [0], [0], [1], [0, 0, 1, 1], [], []>} : vector<8x128xf32>, vector<128x128xf32>, vector<8x128xf32> -> vector<8x128xf32>
    %c0_3 = arith.constant 0 : index
    %c0_4 = arith.constant 0 : index
    %3 = vector.load %arg3[%c0_3, %c0_4] : memref<1x128xf32, #tpu.memory_space<vmem>>, vector<1x128xf32>
    %4 = vector.broadcast %3 : vector<1x128xf32> to vector<8x128xf32>
    %5 = arith.addf %2, %4 : vector<8x128xf32>
    %cst_5 = arith.constant 0.000000e+00 : f32
    %6 = vector.broadcast %cst_5 : f32 to vector<8x128xf32>
    %7 = arith.maximumf %5, %6 : vector<8x128xf32>
    %c0_6 = arith.constant 0 : index
    %c0_7 = arith.constant 0 : index
    %8 = vector.load %arg4[%c0_6, %c0_7] : memref<128x32xf32, #tpu.memory_space<vmem>>, vector<128x32xf32>
    %cst_8 = arith.constant dense<0.000000e+00> : vector<8x32xf32>
    %9 = tpu.matmul %7, %8, %cst_8 {dimension_numbers = #tpu.dot_dimension_numbers<[1], [0], [0], [1], [0, 0, 1, 1], [], []>} : vector<8x128xf32>, vector<128x32xf32>, vector<8x32xf32> -> vector<8x32xf32>
    %c0_9 = arith.constant 0 : index
    %c0_10 = arith.constant 0 : index
    %10 = vector.load %arg5[%c0_9, %c0_10] : memref<1x32xf32, #tpu.memory_space<vmem>>, vector<1x32xf32>
    %11 = vector.broadcast %10 : vector<1x32xf32> to vector<8x32xf32>
    %12 = arith.addf %9, %11 : vector<8x32xf32>
    %c0_11 = arith.constant 0 : index
    %c0_12 = arith.constant 0 : index
    %13 = vector.load %arg6[%c0_11, %c0_12] : memref<8x32xf32, #tpu.memory_space<vmem>>, vector<8x32xf32>
    tpu.vector_store %arg6[%c0_11, %c0_12], %12 {strides = array<i32>} : memref<8x32xf32, #tpu.memory_space<vmem>>, vector<8x32xf32>,
    return
  }
  func.func @transform_0(%arg0: i32) -> (i32, i32) {
    %c0_i32 = arith.constant 0 : i32
    %c0_i32_0 = arith.constant 0 : i32
    return %arg0, %c0_i32 : i32, i32
  }
  func.func @transform_1(%arg0: i32) -> (i32, i32) {
    %c0_i32 = arith.constant 0 : i32
    %c0_i32_0 = arith.constant 0 : i32
    %c0_i32_1 = arith.constant 0 : i32
    return %c0_i32, %c0_i32_0 : i32, i32
  }
  func.func @transform_2(%arg0: i32) -> (i32, i32) {
    %c0_i32 = arith.constant 0 : i32
    %c0_i32_0 = arith.constant 0 : i32
    %c0_i32_1 = arith.constant 0 : i32
    return %c0_i32, %c0_i32_0 : i32, i32
  }
  func.func @transform_3(%arg0: i32) -> (i32, i32) {
    %c0_i32 = arith.constant 0 : i32
    %c0_i32_0 = arith.constant 0 : i32
    %c0_i32_1 = arith.constant 0 : i32
    return %c0_i32, %c0_i32_0 : i32, i32
  }
  func.func @transform_4(%arg0: i32) -> (i32, i32) {
    %c0_i32 = arith.constant 0 : i32
    %c0_i32_0 = arith.constant 0 : i32
    %c0_i32_1 = arith.constant 0 : i32
    return %c0_i32, %c0_i32_0 : i32, i32
  }
  func.func @transform_5(%arg0: i32) -> (i32, i32) {
    %c0_i32 = arith.constant 0 : i32
    %c0_i32_0 = arith.constant 0 : i32
    return %arg0, %c0_i32 : i32, i32
  }
}

</mosaic_0001>

<llo_original>
// kernel: tpu_custom_call.1
$region0: #{tpu_custom_call.1}
  #allocation0 [shape = 'u32[]', space=smem, size = 0x4, offset = 0x4, fixed_abs, tag = 'smem constant byte address 0x4 - core index']
  #allocation1 [shape = 'u32[72,128]{1,0:T(1,128)}', space=vmem, size = 0x9000, scoped, tag = 'internal scratch']
  %s0 = inlined_call_operand.vmem [shape: f32[8,128], index: 0, kind: input, shape index: {}]
  %s1 = inlined_call_operand.vmem [shape: f32[128,128], index: 1, kind: input, shape index: {}]
  %s2 = inlined_call_operand.vmem [shape: f32[1,128], index: 2, kind: input, shape index: {}]
  %s3 = inlined_call_operand.vmem [shape: f32[128,32], index: 3, kind: input, shape index: {}]
  %s4 = inlined_call_operand.vmem [shape: f32[1,32], index: 4, kind: input, shape index: {}]
  %s5 = inlined_call_operand.hbm [shape: f32[8,32], index: 5, kind: output, shape index: {}]
  %s6 = sld [smem:[#allocation0]]
  $region30: #{tpu_custom_call.1} parent=0
    _
  %s8 = ssub.s32 1, %s6
  %s9 = scalar_select 0, %s8, %s6
  $region1: #{tpu_custom_call.1} parent=0
    #allocation2 [shape = 'u8[4096]{0}', space=vmem, size = 0x1000, scoped, tag = 'output window, operand 0, single buffered']
    #allocation3 [shape = 's32[1]{0}', space=sflag, size = 0x4, scoped, tag = 'scoped memory for tpu_custom_call.1']
    %10 = vsyncpa [#allocation3], 0
    // Predicated region
    $region2: #{tpu_custom_call.1} parent=1 // pred_check
      _
    $region3: #{tpu_custom_call.1} parent=1 // pred_check_branch
      %12 = sbr.rel (0) target = $region5
    $region4: #{tpu_custom_call.1} parent=1 // pred_region
      _
    $region5: #{tpu_custom_call.1} parent=1 // pred_fallthru
      _
    // Predicated region
    $region6: #{tpu_custom_call.1} parent=1 // pred_check
      _
    $region7: #{tpu_custom_call.1} parent=1 // pred_check_branch
      %14 = sbr.rel (0) target = $region9
    $region8: #{tpu_custom_call.1} parent=1 // pred_region
      _
    $region9: #{tpu_custom_call.1} parent=1 // pred_fallthru
      _
    // Predicated region
    $region10: #{tpu_custom_call.1} parent=1 // pred_check
      _
    $region11: #{tpu_custom_call.1} parent=1 // pred_check_branch
      %16 = sbr.rel (0) target = $region13
    $region12: #{tpu_custom_call.1} parent=1 // pred_region
      _
    $region13: #{tpu_custom_call.1} parent=1 // pred_fallthru
      _
    // Predicated region
    $region14: #{tpu_custom_call.1} parent=1 // pred_check
      _
    $region15: #{tpu_custom_call.1} parent=1 // pred_check_branch
      %18 = sbr.rel (0) target = $region17
    $region16: #{tpu_custom_call.1} parent=1 // pred_region
      _
    $region17: #{tpu_custom_call.1} parent=1 // pred_fallthru
      _
    // Predicated region
    $region18: #{tpu_custom_call.1} parent=1 // pred_check
      _
    $region19: #{tpu_custom_call.1} parent=1 // pred_check_branch
      %20 = sbr.rel (0) target = $region21
    $region20: #{tpu_custom_call.1} parent=1 // pred_region
      _
    $region21: #{tpu_custom_call.1} parent=1 // pred_fallthru
      _
    %v21 = vld [vmem:[%s0] sm:$0xff]
    %v22 = vld [vmem:[%s1] sm:$0xff]
    %v23 = vld [vmem:[%s1 + $0x8] sm:$0xff]
    %v24 = vld [vmem:[%s1 + $0x10] sm:$0xff]
    %v25 = vld [vmem:[%s1 + $0x18] sm:$0xff]
    %v26 = vld [vmem:[%s1 + $0x20] sm:$0xff]
    %v27 = vld [vmem:[%s1 + $0x28] sm:$0xff]
    %v28 = vld [vmem:[%s1 + $0x30] sm:$0xff]
    %v29 = vld [vmem:[%s1 + $0x38] sm:$0xff]
    %v30 = vld [vmem:[%s1 + $0x40] sm:$0xff]
    %v31 = vld [vmem:[%s1 + $0x48] sm:$0xff]
    %v32 = vld [vmem:[%s1 + $0x50] sm:$0xff]
    %v33 = vld [vmem:[%s1 + $0x58] sm:$0xff]
    %v34 = vld [vmem:[%s1 + $0x60] sm:$0xff]
    %v35 = vld [vmem:[%s1 + $0x68] sm:$0xff]
    %v36 = vld [vmem:[%s1 + $0x70] sm:$0xff]
    %v37 = vld [vmem:[%s1 + $0x78] sm:$0xff]
    %v38 = vld [vmem:[%s2] sm:$0x1]
    %v40 = vperm.slane %v38, 0
    %42 = vmatpush.msra.mxu0 %v37
    %43 = vmatpush.msra.mxu0 %v36
    %44 = vmatpush.msra.mxu0 %v35
    %45 = vmatpush.msra.mxu0 %v34
    %46 = vmatpush.msra.mxu0 %v33
    %47 = vmatpush.msra.mxu0 %v32
    %48 = vmatpush.msra.mxu0 %v31
    %49 = vmatpush.msra.mxu0 %v30
    %50 = vmatpush.msra.mxu0 %v29
    %51 = vmatpush.msra.mxu0 %v28
    %52 = vmatpush.msra.mxu0 %v27
    %53 = vmatpush.msra.mxu0 %v26
    %54 = vmatpush.msra.mxu0 %v25
    %55 = vmatpush.msra.mxu0 %v24
    %56 = vmatpush.msra.mxu0 %v23
    %57 = vmatpush.msra.mxu0 %v22
    %58 = vmatmul.f32.gmra.mxu0 %v21
    %v59 = vpop.f32.mrf.mxu0
    %v60 = vadd.f32 %v40, %v59
    %61 = vdwg.mxu0
    %v62 = vmax.f32 %v60, 0.0
    %v63 = vld [vmem:[%s3] sm:$0xff]
    %v64 = vld [vmem:[%s3 + $0x8] sm:$0xff]
    %v65 = vld [vmem:[%s3 + $0x10] sm:$0xff]
    %v66 = vld [vmem:[%s3 + $0x18] sm:$0xff]
    %v67 = vld [vmem:[%s3 + $0x20] sm:$0xff]
    %v68 = vld [vmem:[%s3 + $0x28] sm:$0xff]
    %v69 = vld [vmem:[%s3 + $0x30] sm:$0xff]
    %v70 = vld [vmem:[%s3 + $0x38] sm:$0xff]
    %v71 = vld [vmem:[%s3 + $0x40] sm:$0xff]
    %v72 = vld [vmem:[%s3 + $0x48] sm:$0xff]
    %v73 = vld [vmem:[%s3 + $0x50] sm:$0xff]
    %v74 = vld [vmem:[%s3 + $0x58] sm:$0xff]
    %v75 = vld [vmem:[%s3 + $0x60] sm:$0xff]
    %v76 = vld [vmem:[%s3 + $0x68] sm:$0xff]
    %v77 = vld [vmem:[%s3 + $0x70] sm:$0xff]
    %v78 = vld [vmem:[%s3 + $0x78] sm:$0xff]
    %v79 = vld [vmem:[%s4] sm:$0x1]
    %v81 = vperm.slane %v79, 0
    %83 = vmatpush.msra.mxu0 %v78
    %84 = vmatpush.msra.mxu0 %v77
    %85 = vmatpush.msra.mxu0 %v76
    %86 = vmatpush.msra.mxu0 %v75
    %87 = vmatpush.msra.mxu0 %v74
    %88 = vmatpush.msra.mxu0 %v73
    %89 = vmatpush.msra.mxu0 %v72
    %90 = vmatpush.msra.mxu0 %v71
    %91 = vmatpush.msra.mxu0 %v70
    %92 = vmatpush.msra.mxu0 %v69
    %93 = vmatpush.msra.mxu0 %v68
    %94 = vmatpush.msra.mxu0 %v67
    %95 = vmatpush.msra.mxu0 %v66
    %96 = vmatpush.msra.mxu0 %v65
    %97 = vmatpush.msra.mxu0 %v64
    %98 = vmatpush.msra.mxu0 %v63
    %99 = vmatmul.f32.gmra.mxu0 %v62
    %v100 = vpop.f32.mrf.mxu0
    %v101 = vadd.f32 %v81, %v100
    %102 = vdwg.mxu0
    %vm103 = vcmask 261120
    %104 = vst.msk [vmem:[#allocation2] sm:$0xff] %vm103, %v101
    // Predicated region
    $region22: #{tpu_custom_call.1} parent=1 // pred_check
      _
    $region23: #{tpu_custom_call.1} parent=1 // pred_check_branch
      %106 = sbr.rel (0) target = $region25
    $region24: #{tpu_custom_call.1} parent=1 // pred_region
      %108 = vsyncadd [#allocation3], 0
      %s110 = sshll.u32 [#allocation2], 4
      %s111 = int_to_ptr.vmem [resolvable:$true] %s110
      %s112 = sshll.u32 %s5, 4
      %s113 = int_to_ptr.hbm [resolvable:$true] %s112
      %115 = dma.vmem_to_hbm [thread:$0]  %s111, 128, %s113, [#allocation3]
    $region25: #{tpu_custom_call.1} parent=1 // pred_fallthru
      _
    // Predicated region
    $region26: #{tpu_custom_call.1} parent=1 // pred_check
      _
    $region27: #{tpu_custom_call.1} parent=1 // pred_check_branch
      %117 = sbr.rel (0) target = $region29
    $region28: #{tpu_custom_call.1} parent=1 // pred_region
      %119 = dma.done [#allocation3], 128
    $region29: #{tpu_custom_call.1} parent=1 // pred_fallthru
      _
    %120 = vsyncpa [#allocation3], 1

</llo_original>
